<compile_context>
chip_gen: v5e
topology: v5e:2x2
jax: 0.10.0
libtpu: 0.0.40
codegen_flags: <defaults>
</compile_context>

<pallas_src>
import functools
import math

import jax
import jax.numpy as jnp
from jax import lax
from jax.experimental import pallas as pl
from jax.experimental.pallas import tpu as pltpu

LANE = 128


def _round_up(x, m):
    return -(-x // m) * m


def _pad2(x, rows, cols):
    return jnp.pad(x, ((0, rows - x.shape[0]), (0, cols - x.shape[1])))


def sac_actor_kernel(
    obs_ref, noise_ref,
    w0_ref, b0_ref, w1_ref, b1_ref, w2_ref, b2_ref, wo_ref, bo_ref,
    out_ref,
    *, action_dim, head_pad, log_std_min, log_std_max,
):
    """Fused 3x(linear+ReLU) trunk + Gaussian head + tanh squash + log-prob."""
    cd = w0_ref.dtype          # matmul input dtype (f32 or bf16); accum stays f32
    x = obs_ref[...]

    # ---- trunk: 3x (linear + relu), act_func == torch.relu ----
    h = jnp.dot(x.astype(cd), w0_ref[...],
                preferred_element_type=jnp.float32) + b0_ref[...]
    h = jnp.maximum(h, 0.0)
    h = jnp.dot(h.astype(cd), w1_ref[...],
                preferred_element_type=jnp.float32) + b1_ref[...]
    h = jnp.maximum(h, 0.0)
    h = jnp.dot(h.astype(cd), w2_ref[...],
                preferred_element_type=jnp.float32) + b2_ref[...]
    h = jnp.maximum(h, 0.0)

    # ---- single merged output-head matmul; split at an aligned 128-lane
    #      boundary: mu in lanes [0, head_pad), log_std in [head_pad, 2*head_pad)
    head = jnp.dot(h.astype(cd), wo_ref[...],
                   preferred_element_type=jnp.float32) + bo_ref[...]
    mu = head[:, :head_pad]
    log_std = head[:, head_pad:]

    # ---- squash log_std into [log_std_min, log_std_max] ----
    log_std = jnp.tanh(log_std)
    log_std = log_std_min + 0.5 * (log_std_max - log_std_min) * (log_std + 1.0)

    # ---- reparameterized sample: pi = mu + noise * std ----
    std = jnp.exp(log_std)
    noise = noise_ref[...]
    pi = mu + noise * std

    # ---- tanh squash ----
    mu_t = jnp.tanh(mu)
    pi_t = jnp.tanh(pi)

    # ---- gaussian_logprob + squash correction, fused into ONE masked reduction
    #      (mask out the lane padding beyond the real action_dim).
    per_dim = (-0.5 * noise * noise - log_std
               - jnp.log(jnp.maximum(1.0 - pi_t * pi_t, 0.0) + 1e-6))
    lane_id = lax.broadcasted_iota(jnp.int32, per_dim.shape, 1)
    per_dim = jnp.where(lane_id < action_dim, per_dim, 0.0)
    log_pi = (jnp.sum(per_dim, axis=-1, keepdims=True)
              - 0.5 * math.log(2.0 * math.pi) * action_dim)

    # ---- four lane-dense, 128-aligned, unmasked stores into one slab ----
    out_ref[:, 0 * head_pad:1 * head_pad] = mu_t
    out_ref[:, 1 * head_pad:2 * head_pad] = pi_t
    out_ref[:, 2 * head_pad:3 * head_pad] = log_std
    out_ref[:, 3 * head_pad:4 * head_pad] = jnp.broadcast_to(log_pi, pi_t.shape)


def sac_actor_forward(obs, noise, params, *, action_dim, log_std_min,
                      log_std_max, batch_tile=None, weight_buffer_count=None,
                      vmem_limit_bytes=None):
    """SacActorMainNetMlp.forward(obs, compute_pi=True, compute_log_pi=True).

    params: output of prepare_params() — lane-padded, pre-transposed weights
            'w0','w1','w2' (in,out), merged head 'wo' (hidden_pad, 2*head_pad)
            (f32 or bf16), and f32 biases 'b0','b1','b2','bo' of shape (1,out).
    noise:  (batch, action_dim) standard-normal sample (torch.randn_like(mu)).
    Returns (mu, pi, log_pi, log_std) as float32.
    """
    B, obs_dim = obs.shape
    OP, HP = params["w0"].shape            # padded obs / hidden widths
    AP = params["wo"].shape[1] // 2        # padded per-head width (128 multiple)
    assert noise.shape == (B, action_dim), (noise.shape, B, action_dim)

    # --- batch tiling: ~8 grid steps, tile a multiple of 8, capped at 256 rows ---
    if batch_tile is None:
        batch_tile = min(256, max(8, _round_up(pl.cdiv(B, 8), 8)))
    Bp = _round_up(B, batch_tile)
    steps = Bp // batch_tile

    # --- zero-pad batch rows + feature lanes (exact: padded weights are zero) ---
    obs_p = jnp.pad(obs.astype(jnp.float32), ((0, Bp - B), (0, OP - obs_dim)))
    noise_p = jnp.pad(noise.astype(jnp.float32),
                      ((0, Bp - B), (0, AP - action_dim)))

    # --- explicit scoped-VMEM budget (resident weights + pipelined I/O + temps) ---
    if vmem_limit_bytes is None:
        wbuf = 2 if weight_buffer_count is None else weight_buffer_count
        weight_bytes = sum(
            int(params[k].size) * params[k].dtype.itemsize
            for k in ("w0", "b0", "w1", "b1", "w2", "b2", "wo", "bo"))
        io_bytes = 2 * batch_tile * (OP + AP + 4 * AP) * 4     # double-buffered I/O
        live_bytes = 6 * batch_tile * max(HP, 2 * AP) * 4      # in-kernel f32 temps
        vmem_limit_bytes = weight_bytes * wbuf + io_bytes + live_bytes + (4 << 20)
        vmem_limit_bytes = int(min(max(vmem_limit_bytes, 32 << 20), 128 << 20))

    def batched(width):
        return pl.BlockSpec((batch_tile, width), lambda i: (i, 0))

    def invariant(arr):
        # Constant index_map -> block stays VMEM-resident across grid steps.
        # weight_buffer_count=1 (v7x / large hidden) halves the weight footprint.
        if weight_buffer_count is None:
            return pl.BlockSpec(arr.shape, lambda i: (0, 0))
        return pl.BlockSpec(arr.shape, lambda i: (0, 0),
                            pipeline_mode=pl.Buffered(weight_buffer_count))

    kernel = functools.partial(
        sac_actor_kernel, action_dim=action_dim, head_pad=AP,
        log_std_min=float(log_std_min), log_std_max=float(log_std_max))

    slab = pl.pallas_call(
        kernel,
        out_shape=jax.ShapeDtypeStruct((Bp, 4 * AP), jnp.float32),
        grid=(steps,),
        in_specs=[
            batched(OP),                 # obs
            batched(AP),                 # noise
            invariant(params["w0"]), invariant(params["b0"]),
            invariant(params["w1"]), invariant(params["b1"]),
            invariant(params["w2"]), invariant(params["b2"]),
            invariant(params["wo"]), invariant(params["bo"]),
        ],
        out_specs=pl.BlockSpec((batch_tile, 4 * AP), lambda i: (i, 0)),
        compiler_params=pltpu.CompilerParams(
            dimension_semantics=("parallel",) if steps > 1 else ("arbitrary",),
            vmem_limit_bytes=vmem_limit_bytes),
    )(obs_p, noise_p,
      params["w0"], params["b0"], params["w1"], params["b1"],
      params["w2"], params["b2"], params["wo"], params["bo"])

    A = action_dim
    mu = slab[:B, 0:A]
    pi = slab[:B, AP:AP + A]
    log_std = slab[:B, 2 * AP:2 * AP + A]
    log_pi = slab[:B, 3 * AP:3 * AP + 1]
    return mu, pi, log_pi, log_std


def prepare_params(raw, weight_dtype=jnp.bfloat16):
    """Lane-pad every dim to a 128 multiple, merge the mu/log_std heads into one
    (hidden_pad, 2*head_pad) weight with each head in its own aligned 128-lane
    slot, and cast weights (biases stay f32 for the epilogue).  bf16 weights are
    the default: the kernel is weight-HBM-bound at realistic SAC sizes."""
    O, H = raw["w0"].shape
    A = raw["wo"].shape[1] // 2
    OP, HP, AP = _round_up(O, LANE), _round_up(H, LANE), _round_up(A, LANE)
    p = {}
    for n, din in zip(("0", "1", "2"), (OP, HP, HP)):
        p["w" + n] = _pad2(raw["w" + n], din, HP).astype(weight_dtype)
        p["b" + n] = _pad2(raw["b" + n], 1, HP).astype(jnp.float32)
    p["wo"] = jnp.concatenate(
        [_pad2(raw["wo"][:, :A], HP, AP), _pad2(raw["wo"][:, A:], HP, AP)],
        axis=1).astype(weight_dtype)
    p["bo"] = jnp.concatenate(
        [_pad2(raw["bo"][:, :A], 1, AP), _pad2(raw["bo"][:, A:], 1, AP)],
        axis=1).astype(jnp.float32)
    return p


def init_params(key, obs_dim, action_dim, hidden_dim):
    """Synthetic init matching SacActorMainNetMlp weight_shapes, pre-transposed
    to (in, out), biases reshaped to (1, out).  Output layer kept fused (as in
    the PyTorch module); prepare_params() splits/pads it."""
    dims_in = [obs_dim, hidden_dim, hidden_dim, hidden_dim]
    dims_out = [hidden_dim, hidden_dim, hidden_dim, 2 * action_dim]
    names = ["0", "1", "2", "o"]
    params = {}
    for name, din, dout in zip(names, dims_in, dims_out):
        key, kw, kb = jax.random.split(key, 3)
        scale = 1.0 / math.sqrt(din)
        params["w" + name] = (scale * jax.random.normal(kw, (din, dout))
                              ).astype(jnp.float32)
        params["b" + name] = (scale * jax.random.normal(kb, (1, dout))
                              ).astype(jnp.float32)
    return params


def reference_forward(obs, noise, raw, *, weight_dtype, log_std_min, log_std_max):
    """Pure-JAX reference mirroring the PyTorch forward (same compute dtype)."""
    h = obs
    for n in ("0", "1", "2"):
        h = jnp.dot(h.astype(weight_dtype), raw["w" + n].astype(weight_dtype),
                    preferred_element_type=jnp.float32) + raw["b" + n]
        h = jnp.maximum(h, 0.0)
    out = jnp.dot(h.astype(weight_dtype), raw["wo"].astype(weight_dtype),
                  preferred_element_type=jnp.float32) + raw["bo"]
    A = out.shape[-1] // 2
    mu, log_std = out[:, :A], out[:, A:]
    log_std = jnp.tanh(log_std)
    log_std = log_std_min + 0.5 * (log_std_max - log_std_min) * (log_std + 1.0)
    std = jnp.exp(log_std)
    pi = mu + noise * std
    log_pi = (jnp.sum(-0.5 * noise ** 2 - log_std, axis=-1, keepdims=True)
              - 0.5 * math.log(2.0 * math.pi) * A)
    mu_t, pi_t = jnp.tanh(mu), jnp.tanh(pi)
    log_pi = log_pi - jnp.sum(
        jnp.log(jnp.maximum(1.0 - pi_t ** 2, 0.0) + 1e-6), axis=-1, keepdims=True)
    return mu_t, pi_t, log_pi, log_std


if __name__ == "__main__":
    B, OBS_DIM, HIDDEN, ACT_DIM = 8, 16, 32, 4
    LOG_STD_MIN, LOG_STD_MAX = -10.0, 2.0

    key = jax.random.PRNGKey(0)
    key, k_obs, k_noise, k_par = jax.random.split(key, 4)

    obs = jax.random.normal(k_obs, (B, OBS_DIM), dtype=jnp.float32)
    # TODO(synk): torch.randn_like(mu) is generated host-side and passed in so
    # the kernel stays deterministic; pltpu.prng_* could move it in-kernel.
    noise = jax.random.normal(k_noise, (B, ACT_DIM), dtype=jnp.float32)
    raw = init_params(k_par, OBS_DIM, ACT_DIM, HIDDEN)

    # --- default bf16-weight path (weight-HBM-bound regime): loose tolerance ---
    params_bf16 = prepare_params(raw)          # bf16 weights by default
    outs16 = sac_actor_forward(obs, noise, params_bf16, action_dim=ACT_DIM,
                               log_std_min=LOG_STD_MIN, log_std_max=LOG_STD_MAX)
    jax.block_until_ready(outs16)
    ref16 = reference_forward(obs, noise, raw, weight_dtype=jnp.bfloat16,
                              log_std_min=LOG_STD_MIN, log_std_max=LOG_STD_MAX)
    for got, want in zip(outs16, ref16):
        assert got.shape == want.shape, (got.shape, want.shape)
        assert jnp.allclose(got, want, atol=3e-2, rtol=3e-2), (got, want)

    # --- f32-weight path: tight correctness check ---
    params_f32 = prepare_params(raw, jnp.float32)
    outs = sac_actor_forward(obs, noise, params_f32, action_dim=ACT_DIM,
                             log_std_min=LOG_STD_MIN, log_std_max=LOG_STD_MAX)
    jax.block_until_ready(outs)
    ref = reference_forward(obs, noise, raw, weight_dtype=jnp.float32,
                            log_std_min=LOG_STD_MIN, log_std_max=LOG_STD_MAX)
    for got, want in zip(outs, ref):
        assert got.shape == want.shape and got.dtype == want.dtype, (got, want)
        assert jnp.allclose(got, want, atol=1e-3, rtol=1e-3), (got, want)

    print("KERNEL_OK")
</pallas_src>

<mosaic_0001>
module attributes {stable_mosaic.version = 11 : i64} {
  func.func @sac_actor_kernel(%arg0: i32, %arg1: memref<8x128xf32, #tpu.memory_space<vmem>>, %arg2: memref<8x128xf32, #tpu.memory_space<vmem>>, %arg3: memref<128x128xbf16, #tpu.memory_space<vmem>>, %arg4: memref<1x128xf32, #tpu.memory_space<vmem>>, %arg5: memref<128x128xbf16, #tpu.memory_space<vmem>>, %arg6: memref<1x128xf32, #tpu.memory_space<vmem>>, %arg7: memref<128x128xbf16, #tpu.memory_space<vmem>>, %arg8: memref<1x128xf32, #tpu.memory_space<vmem>>, %arg9: memref<128x256xbf16, #tpu.memory_space<vmem>>, %arg10: memref<1x256xf32, #tpu.memory_space<vmem>>, %arg11: memref<8x512xf32, #tpu.memory_space<vmem>>) attributes {dimension_semantics = [#tpu.dimension_semantics<arbitrary>], iteration_bounds = array<i64: 1>, scalar_prefetch = 0 : i64, scratch_operands = 0 : i64, tpu.core_type = #tpu.core_type<tc>, window_params = [{transform_indices = @transform_0, window_bounds = array<i64: 8, 128>}, {transform_indices = @transform_1, window_bounds = array<i64: 8, 128>}, {pipeline_mode = #tpu.pipeline_mode<synchronous>, transform_indices = @transform_2, window_bounds = array<i64: 128, 128>}, {pipeline_mode = #tpu.pipeline_mode<synchronous>, transform_indices = @transform_3, window_bounds = array<i64: 1, 128>}, {pipeline_mode = #tpu.pipeline_mode<synchronous>, transform_indices = @transform_4, window_bounds = array<i64: 128, 128>}, {pipeline_mode = #tpu.pipeline_mode<synchronous>, transform_indices = @transform_5, window_bounds = array<i64: 1, 128>}, {pipeline_mode = #tpu.pipeline_mode<synchronous>, transform_indices = @transform_6, window_bounds = array<i64: 128, 128>}, {pipeline_mode = #tpu.pipeline_mode<synchronous>, transform_indices = @transform_7, window_bounds = array<i64: 1, 128>}, {pipeline_mode = #tpu.pipeline_mode<synchronous>, transform_indices = @transform_8, window_bounds = array<i64: 128, 256>}, {pipeline_mode = #tpu.pipeline_mode<synchronous>, transform_indices = @transform_9, window_bounds = array<i64: 1, 256>}, {transform_indices = @transform_10, window_bounds = array<i64: 8, 512>}]} {
    %c0 = arith.constant 0 : index
    %c0_0 = arith.constant 0 : index
    %0 = vector.load %arg1[%c0, %c0_0] : memref<8x128xf32, #tpu.memory_space<vmem>>, vector<8x128xf32>
    %1 = arith.truncf %0 : vector<8x128xf32> to vector<8x128xbf16>
    %c0_1 = arith.constant 0 : index
    %c0_2 = arith.constant 0 : index
    %2 = vector.load %arg3[%c0_1, %c0_2] : memref<128x128xbf16, #tpu.memory_space<vmem>>, vector<128x128xbf16>
    %cst = arith.constant dense<0.000000e+00> : vector<8x128xf32>
    %3 = tpu.matmul %1, %2, %cst {dimension_numbers = #tpu.dot_dimension_numbers<[1], [0], [0], [1], [0, 0, 1, 1], [], []>} : vector<8x128xbf16>, vector<128x128xbf16>, vector<8x128xf32> -> vector<8x128xf32>
    %c0_3 = arith.constant 0 : index
    %c0_4 = arith.constant 0 : index
    %4 = vector.load %arg4[%c0_3, %c0_4] : memref<1x128xf32, #tpu.memory_space<vmem>>, vector<1x128xf32>
    %5 = vector.broadcast %4 : vector<1x128xf32> to vector<8x128xf32>
    %6 = arith.addf %3, %5 : vector<8x128xf32>
    %cst_5 = arith.constant 0.000000e+00 : f32
    %7 = vector.broadcast %cst_5 : f32 to vector<8x128xf32>
    %8 = arith.maximumf %6, %7 : vector<8x128xf32>
    %9 = arith.truncf %8 : vector<8x128xf32> to vector<8x128xbf16>
    %c0_6 = arith.constant 0 : index
    %c0_7 = arith.constant 0 : index
    %10 = vector.load %arg5[%c0_6, %c0_7] : memref<128x128xbf16, #tpu.memory_space<vmem>>, vector<128x128xbf16>
    %cst_8 = arith.constant dense<0.000000e+00> : vector<8x128xf32>
    %11 = tpu.matmul %9, %10, %cst_8 {dimension_numbers = #tpu.dot_dimension_numbers<[1], [0], [0], [1], [0, 0, 1, 1], [], []>} : vector<8x128xbf16>, vector<128x128xbf16>, vector<8x128xf32> -> vector<8x128xf32>
    %c0_9 = arith.constant 0 : index
    %c0_10 = arith.constant 0 : index
    %12 = vector.load %arg6[%c0_9, %c0_10] : memref<1x128xf32, #tpu.memory_space<vmem>>, vector<1x128xf32>
    %13 = vector.broadcast %12 : vector<1x128xf32> to vector<8x128xf32>
    %14 = arith.addf %11, %13 : vector<8x128xf32>
    %cst_11 = arith.constant 0.000000e+00 : f32
    %15 = vector.broadcast %cst_11 : f32 to vector<8x128xf32>
    %16 = arith.maximumf %14, %15 : vector<8x128xf32>
    %17 = arith.truncf %16 : vector<8x128xf32> to vector<8x128xbf16>
    %c0_12 = arith.constant 0 : index
    %c0_13 = arith.constant 0 : index
    %18 = vector.load %arg7[%c0_12, %c0_13] : memref<128x128xbf16, #tpu.memory_space<vmem>>, vector<128x128xbf16>
    %cst_14 = arith.constant dense<0.000000e+00> : vector<8x128xf32>
    %19 = tpu.matmul %17, %18, %cst_14 {dimension_numbers = #tpu.dot_dimension_numbers<[1], [0], [0], [1], [0, 0, 1, 1], [], []>} : vector<8x128xbf16>, vector<128x128xbf16>, vector<8x128xf32> -> vector<8x128xf32>
    %c0_15 = arith.constant 0 : index
    %c0_16 = arith.constant 0 : index
    %20 = vector.load %arg8[%c0_15, %c0_16] : memref<1x128xf32, #tpu.memory_space<vmem>>, vector<1x128xf32>
    %21 = vector.broadcast %20 : vector<1x128xf32> to vector<8x128xf32>
    %22 = arith.addf %19, %21 : vector<8x128xf32>
    %cst_17 = arith.constant 0.000000e+00 : f32
    %23 = vector.broadcast %cst_17 : f32 to vector<8x128xf32>
    %24 = arith.maximumf %22, %23 : vector<8x128xf32>
    %25 = arith.truncf %24 : vector<8x128xf32> to vector<8x128xbf16>
    %c0_18 = arith.constant 0 : index
    %c0_19 = arith.constant 0 : index
    %26 = vector.load %arg9[%c0_18, %c0_19] : memref<128x256xbf16, #tpu.memory_space<vmem>>, vector<128x256xbf16>
    %cst_20 = arith.constant dense<0.000000e+00> : vector<8x256xf32>
    %27 = tpu.matmul %25, %26, %cst_20 {dimension_numbers = #tpu.dot_dimension_numbers<[1], [0], [0], [1], [0, 0, 1, 1], [], []>} : vector<8x128xbf16>, vector<128x256xbf16>, vector<8x256xf32> -> vector<8x256xf32>
    %c0_21 = arith.constant 0 : index
    %c0_22 = arith.constant 0 : index
    %28 = vector.load %arg10[%c0_21, %c0_22] : memref<1x256xf32, #tpu.memory_space<vmem>>, vector<1x256xf32>
    %29 = vector.broadcast %28 : vector<1x256xf32> to vector<8x256xf32>
    %30 = arith.addf %27, %29 : vector<8x256xf32>
    %31 = vector.extract_strided_slice %30 {offsets = [0, 0], sizes = [8, 128], strides = [1, 1]} : vector<8x256xf32> to vector<8x128xf32>
    %32 = vector.extract_strided_slice %30 {offsets = [0, 128], sizes = [8, 128], strides = [1, 1]} : vector<8x256xf32> to vector<8x128xf32>
    %33 = math.tanh %32 : vector<8x128xf32>
    %cst_23 = arith.constant 1.000000e+00 : f32
    %34 = vector.broadcast %cst_23 : f32 to vector<8x128xf32>
    %35 = arith.addf %33, %34 : vector<8x128xf32>
    %cst_24 = arith.constant 6.000000e+00 : f32
    %36 = vector.broadcast %cst_24 : f32 to vector<8x128xf32>
    %37 = arith.mulf %36, %35 : vector<8x128xf32>
    %cst_25 = arith.constant -1.000000e+01 : f32
    %38 = vector.broadcast %cst_25 : f32 to vector<8x128xf32>
    %39 = arith.addf %38, %37 : vector<8x128xf32>
    %40 = math.exp %39 : vector<8x128xf32>
    %c0_26 = arith.constant 0 : index
    %c0_27 = arith.constant 0 : index
    %41 = vector.load %arg2[%c0_26, %c0_27] : memref<8x128xf32, #tpu.memory_space<vmem>>, vector<8x128xf32>
    %42 = arith.mulf %41, %40 : vector<8x128xf32>
    %43 = arith.addf %31, %42 : vector<8x128xf32>
    %44 = math.tanh %31 : vector<8x128xf32>
    %45 = math.tanh %43 : vector<8x128xf32>
    %cst_28 = arith.constant -5.000000e-01 : f32
    %46 = vector.broadcast %cst_28 : f32 to vector<8x128xf32>
    %47 = arith.mulf %46, %41 : vector<8x128xf32>
    %48 = arith.mulf %47, %41 : vector<8x128xf32>
    %49 = arith.subf %48, %39 : vector<8x128xf32>
    %50 = arith.mulf %45, %45 : vector<8x128xf32>
    %cst_29 = arith.constant 1.000000e+00 : f32
    %51 = vector.broadcast %cst_29 : f32 to vector<8x128xf32>
    %52 = arith.subf %51, %50 : vector<8x128xf32>
    %cst_30 = arith.constant 0.000000e+00 : f32
    %53 = vector.broadcast %cst_30 : f32 to vector<8x128xf32>
    %54 = arith.maximumf %52, %53 : vector<8x128xf32>
    %cst_31 = arith.constant 9.99999997E-7 : f32
    %55 = vector.broadcast %cst_31 : f32 to vector<8x128xf32>
    %56 = arith.addf %54, %55 : vector<8x128xf32>
    %57 = math.log %56 : vector<8x128xf32>
    %58 = arith.subf %49, %57 : vector<8x128xf32>
    %59 = tpu.iota {dimensions = array<i32: 1>} : vector<8x128xi32>
    %c4_i32 = arith.constant 4 : i32
    %60 = vector.broadcast %c4_i32 : i32 to vector<8x128xi32>
    %61 = arith.cmpi slt, %59, %60 : vector<8x128xi32>
    %cst_32 = arith.constant 0.000000e+00 : f32
    %62 = vector.broadcast %cst_32 : f32 to vector<8x128xf32>
    %63 = arith.select %61, %58, %62 : vector<8x128xi1>, vector<8x128xf32>
    %cst_33 = arith.constant dense<0.000000e+00> : vector<8xf32>
    %64 = vector.multi_reduction <add>, %63, %cst_33 [1] : vector<8x128xf32> to vector<8xf32>
    %65 = vector.shape_cast %64 : vector<8xf32> to vector<8x1xf32>
    %cst_34 = arith.constant 3.67575407 : f32
    %66 = vector.broadcast %cst_34 : f32 to vector<8x1xf32>
    %67 = arith.subf %65, %66 : vector<8x1xf32>
    %c0_35 = arith.constant 0 : index
    %c0_36 = arith.constant 0 : index
    %68 = vector.load %arg11[%c0_35, %c0_36] : memref<8x512xf32, #tpu.memory_space<vmem>>, vector<8x128xf32>
    tpu.vector_store %arg11[%c0_35, %c0_36], %44 {strides = array<i32>} : memref<8x512xf32, #tpu.memory_space<vmem>>, vector<8x128xf32>,
    %c0_37 = arith.constant 0 : index
    %c128 = arith.constant 128 : index
    %69 = vector.load %arg11[%c0_37, %c128] : memref<8x512xf32, #tpu.memory_space<vmem>>, vector<8x128xf32>
    tpu.vector_store %arg11[%c0_37, %c128], %45 {strides = array<i32>} : memref<8x512xf32, #tpu.memory_space<vmem>>, vector<8x128xf32>,
    %c0_38 = arith.constant 0 : index
    %c256 = arith.constant 256 : index
    %70 = vector.load %arg11[%c0_38, %c256] : memref<8x512xf32, #tpu.memory_space<vmem>>, vector<8x128xf32>
    tpu.vector_store %arg11[%c0_38, %c256], %39 {strides = array<i32>} : memref<8x512xf32, #tpu.memory_space<vmem>>, vector<8x128xf32>,
    %71 = vector.shape_cast %67 : vector<8x1xf32> to vector<8x1xf32>
    %72 = vector.broadcast %71 : vector<8x1xf32> to vector<8x128xf32>
    %c0_39 = arith.constant 0 : index
    %c384 = arith.constant 384 : index
    %73 = vector.load %arg11[%c0_39, %c384] : memref<8x512xf32, #tpu.memory_space<vmem>>, vector<8x128xf32>
    tpu.vector_store %arg11[%c0_39, %c384], %72 {strides = array<i32>} : memref<8x512xf32, #tpu.memory_space<vmem>>, vector<8x128xf32>,
    return
  }
  func.func @transform_0(%arg0: i32) -> (i32, i32) {
    %c0_i32 = arith.constant 0 : i32
    %c0_i32_0 = arith.constant 0 : i32
    return %arg0, %c0_i32 : i32, i32
  }
  func.func @transform_1(%arg0: i32) -> (i32, i32) {
    %c0_i32 = arith.constant 0 : i32
    %c0_i32_0 = arith.constant 0 : i32
    return %arg0, %c0_i32 : i32, i32
  }
  func.func @transform_2(%arg0: i32) -> (i32, i32) {
    %c0_i32 = arith.constant 0 : i32
    %c0_i32_0 = arith.constant 0 : i32
    %c0_i32_1 = arith.constant 0 : i32
    return %c0_i32, %c0_i32_0 : i32, i32
  }
  func.func @transform_3(%arg0: i32) -> (i32, i32) {
    %c0_i32 = arith.constant 0 : i32
    %c0_i32_0 = arith.constant 0 : i32
    %c0_i32_1 = arith.constant 0 : i32
    return %c0_i32, %c0_i32_0 : i32, i32
  }
  func.func @transform_4(%arg0: i32) -> (i32, i32) {
    %c0_i32 = arith.constant 0 : i32
    %c0_i32_0 = arith.constant 0 : i32
    %c0_i32_1 = arith.constant 0 : i32
    return %c0_i32, %c0_i32_0 : i32, i32
  }
  func.func @transform_5(%arg0: i32) -> (i32, i32) {
    %c0_i32 = arith.constant 0 : i32
    %c0_i32_0 = arith.constant 0 : i32
    %c0_i32_1 = arith.constant 0 : i32
    return %c0_i32, %c0_i32_0 : i32, i32
  }
  func.func @transform_6(%arg0: i32) -> (i32, i32) {
    %c0_i32 = arith.constant 0 : i32
    %c0_i32_0 = arith.constant 0 : i32
    %c0_i32_1 = arith.constant 0 : i32
    return %c0_i32, %c0_i32_0 : i32, i32
  }
  func.func @transform_7(%arg0: i32) -> (i32, i32) {
    %c0_i32 = arith.constant 0 : i32
    %c0_i32_0 = arith.constant 0 : i32
    %c0_i32_1 = arith.constant 0 : i32
    return %c0_i32, %c0_i32_0 : i32, i32
  }
  func.func @transform_8(%arg0: i32) -> (i32, i32) {
    %c0_i32 = arith.constant 0 : i32
    %c0_i32_0 = arith.constant 0 : i32
    %c0_i32_1 = arith.constant 0 : i32
    return %c0_i32, %c0_i32_0 : i32, i32
  }
  func.func @transform_9(%arg0: i32) -> (i32, i32) {
    %c0_i32 = arith.constant 0 : i32
    %c0_i32_0 = arith.constant 0 : i32
    %c0_i32_1 = arith.constant 0 : i32
    return %c0_i32, %c0_i32_0 : i32, i32
  }
  func.func @transform_10(%arg0: i32) -> (i32, i32) {
    %c0_i32 = arith.constant 0 : i32
    %c0_i32_0 = arith.constant 0 : i32
    return %arg0, %c0_i32 : i32, i32
  }
}

</mosaic_0001>

<llo_original>
// kernel: tpu_custom_call.1
$region0: #{tpu_custom_call.1}
  #allocation0 [shape = 'u32[]', space=smem, size = 0x4, offset = 0x4, fixed_abs, tag = 'smem constant byte address 0x4 - core index']
  #allocation1 [shape = 'u32[72,128]{1,0:T(1,128)}', space=vmem, size = 0x9000, scoped, tag = 'internal scratch']
  %s0 = inlined_call_operand.hbm [shape: f32[8,128], index: 0, kind: input, shape index: {}]
  %s1 = inlined_call_operand.hbm [shape: f32[8,128], index: 1, kind: input, shape index: {}]
  %s2 = inlined_call_operand.hbm [shape: bf16[128,128], index: 2, kind: input, shape index: {}]
  %s3 = inlined_call_operand.vmem [shape: f32[1,128], index: 3, kind: input, shape index: {}]
  %s4 = inlined_call_operand.hbm [shape: bf16[128,128], index: 4, kind: input, shape index: {}]
  %s5 = inlined_call_operand.vmem [shape: f32[1,128], index: 5, kind: input, shape index: {}]
  %s6 = inlined_call_operand.hbm [shape: bf16[128,128], index: 6, kind: input, shape index: {}]
  %s7 = inlined_call_operand.vmem [shape: f32[1,128], index: 7, kind: input, shape index: {}]
  %s8 = inlined_call_operand.hbm [shape: bf16[128,256], index: 8, kind: input, shape index: {}]
  %s9 = inlined_call_operand.vmem [shape: f32[1,256], index: 9, kind: input, shape index: {}]
  %s10 = inlined_call_operand.hbm [shape: f32[8,512], index: 10, kind: output, shape index: {}]
  %s11 = sld [smem:[#allocation0]]
  $region74: #{tpu_custom_call.1} parent=0
    _
  %s13 = ssub.s32 1, %s11
  %s14 = scalar_select 0, %s13, %s11
  $region1: #{tpu_custom_call.1} parent=0
    #allocation2 [shape = 'u8[4096]{0}', space=vmem, size = 0x1000, scoped, tag = 'input window, operand 0, single buffered']
    #allocation3 [shape = 's32[1]{0}', space=sflag, size = 0x4, scoped, tag = 'scoped memory for tpu_custom_call.1']
    #allocation4 [shape = 's32[1]{0}', space=sflag, size = 0x4, scoped, tag = 'scoped memory for tpu_custom_call.1']
    #allocation5 [shape = 'u8[4096]{0}', space=vmem, size = 0x1000, scoped, tag = 'input window, operand 1, single buffered']
    #allocation6 [shape = 's32[1]{0}', space=sflag, size = 0x4, scoped, tag = 'scoped memory for tpu_custom_call.1']
    #allocation7 [shape = 'u8[32768]{0}', space=vmem, size = 0x8000, scoped, tag = 'input window, operand 2, single buffered']
    #allocation8 [shape = 'u8[32768]{0}', space=vmem, size = 0x8000, scoped, tag = 'input window, operand 4, single buffered']
    #allocation9 [shape = 's32[1]{0}', space=sflag, size = 0x4, scoped, tag = 'scoped memory for tpu_custom_call.1']
    #allocation10 [shape = 'u8[32768]{0}', space=vmem, size = 0x8000, scoped, tag = 'input window, operand 6, single buffered']
    #allocation11 [shape = 'u8[65536]{0}', space=vmem, size = 0x10000, scoped, tag = 'input window, operand 8, single buffered']
    #allocation12 [shape = 's32[1]{0}', space=sflag, size = 0x4, scoped, tag = 'scoped memory for tpu_custom_call.1']
    #allocation13 [shape = 'u8[16384]{0}', space=vmem, size = 0x4000, scoped, tag = 'output window, operand 0, single buffered']
    %15 = vsyncpa [#allocation3], 0
    %16 = vsyncpa [#allocation6], 0
    %17 = vsyncpa [#allocation9], 0
    %18 = vsyncpa [#allocation12], 0
    %19 = vsyncpa [#allocation4], 0
    // Predicated region
    $region2: #{tpu_custom_call.1} parent=1 // pred_check
      _
    $region3: #{tpu_custom_call.1} parent=1 // pred_check_branch
      %21 = sbr.rel (0) target = $region5
    $region4: #{tpu_custom_call.1} parent=1 // pred_region
      %23 = vsyncadd [#allocation3], 0
      %s25 = sshll.u32 %s0, 4
      %s26 = int_to_ptr.hbm [resolvable:$true] %s25
      %s27 = sshll.u32 [#allocation2], 4
      %s28 = int_to_ptr.vmem [resolvable:$true] %s27
      %30 = dma.hbm_to_vmem [thread:$0]  %s26, 128, %s28, [#allocation3]
    $region5: #{tpu_custom_call.1} parent=1 // pred_fallthru
      _
    // Predicated region
    $region6: #{tpu_custom_call.1} parent=1 // pred_check
      _
    $region7: #{tpu_custom_call.1} parent=1 // pred_check_branch
      %32 = sbr.rel (0) target = $region9
    $region8: #{tpu_custom_call.1} parent=1 // pred_region
      %34 = vsyncadd [#allocation6], 0
      %s36 = sshll.u32 %s1, 4
      %s37 = int_to_ptr.hbm [resolvable:$true] %s36
      %s38 = sshll.u32 [#allocation5], 4
      %s39 = int_to_ptr.vmem [resolvable:$true] %s38
      %41 = dma.hbm_to_vmem [thread:$0]  %s37, 128, %s39, [#allocation6]
    $region9: #{tpu_custom_call.1} parent=1 // pred_fallthru
      _
    // Predicated region
    $region10: #{tpu_custom_call.1} parent=1 // pred_check
      _
    $region11: #{tpu_custom_call.1} parent=1 // pred_check_branch
      %43 = sbr.rel (0) target = $region13
    $region12: #{tpu_custom_call.1} parent=1 // pred_region
      %45 = vsyncadd [#allocation6], 0
      %s46 = sshll.u32 %s2, 4
      %s47 = int_to_ptr.hbm [resolvable:$true] %s46
      %s48 = sshll.u32 [#allocation7], 4
      %s49 = int_to_ptr.vmem [resolvable:$true] %s48
      %54 = dma.hbm_to_vmem [thread:$0]  %s47, 1024, %s49, [#allocation6], 64, 64, 4
    $region13: #{tpu_custom_call.1} parent=1 // pred_fallthru
      _
    // Predicated region
    $region14: #{tpu_custom_call.1} parent=1 // pred_check
      _
    $region15: #{tpu_custom_call.1} parent=1 // pred_check_branch
      %56 = sbr.rel (0) target = $region17
    $region16: #{tpu_custom_call.1} parent=1 // pred_region
      _
    $region17: #{tpu_custom_call.1} parent=1 // pred_fallthru
      _
    // Predicated region
    $region18: #{tpu_custom_call.1} parent=1 // pred_check
      _
    $region19: #{tpu_custom_call.1} parent=1 // pred_check_branch
      %58 = sbr.rel (0) target = $region21
    $region20: #{tpu_custom_call.1} parent=1 // pred_region
      %60 = vsyncadd [#allocation9], 0
      %s61 = sshll.u32 %s4, 4
      %s62 = int_to_ptr.hbm [resolvable:$true] %s61
      %s63 = sshll.u32 [#allocation8], 4
      %s64 = int_to_ptr.vmem [resolvable:$true] %s63
      %69 = dma.hbm_to_vmem [thread:$0]  %s62, 1024, %s64, [#allocation9], 64, 64, 4
    $region21: #{tpu_custom_call.1} parent=1 // pred_fallthru
      _
    // Predicated region
    $region22: #{tpu_custom_call.1} parent=1 // pred_check
      _
    $region23: #{tpu_custom_call.1} parent=1 // pred_check_branch
      %71 = sbr.rel (0) target = $region25
    $region24: #{tpu_custom_call.1} parent=1 // pred_region
      _
    $region25: #{tpu_custom_call.1} parent=1 // pred_fallthru
      _
    // Predicated region
    $region26: #{tpu_custom_call.1} parent=1 // pred_check
      _
    $region27: #{tpu_custom_call.1} parent=1 // pred_check_branch
      %73 = sbr.rel (0) target = $region29
    $region28: #{tpu_custom_call.1} parent=1 // pred_region
      %75 = vsyncadd [#allocation9], 0
      %s76 = sshll.u32 %s6, 4
      %s77 = int_to_ptr.hbm [resolvable:$true] %s76
      %s78 = sshll.u32 [#allocation10], 4
      %s79 = int_to_ptr.vmem [resolvable:$true] %s78
      %84 = dma.hbm_to_vmem [thread:$0]  %s77, 1024, %s79, [#allocation9], 64, 64, 4
    $region29: #{tpu_custom_call.1} parent=1 // pred_fallthru
      _
    // Predicated region
    $region30: #{tpu_custom_call.1} parent=1 // pred_check
      _
    $region31: #{tpu_custom_call.1} parent=1 // pred_check_branch
      %86 = sbr.rel (0) target = $region33
    $region32: #{tpu_custom_call.1} parent=1 // pred_region
      _
    $region33: #{tpu_custom_call.1} parent=1 // pred_fallthru
      _
    // Predicated region
    $region34: #{tpu_custom_call.1} parent=1 // pred_check
      _
    $region35: #{tpu_custom_call.1} parent=1 // pred_check_branch
      %88 = sbr.rel (0) target = $region37
    $region36: #{tpu_custom_call.1} parent=1 // pred_region
      %90 = vsyncadd [#allocation12], 0
      %s91 = sshll.u32 %s8, 4
      %s92 = int_to_ptr.hbm [resolvable:$true] %s91
      %s93 = sshll.u32 [#allocation11], 4
      %s94 = int_to_ptr.vmem [resolvable:$true] %s93
      %99 = dma.hbm_to_vmem [thread:$0]  %s92, 2048, %s94, [#allocation12], 128, 128, 8
    $region37: #{tpu_custom_call.1} parent=1 // pred_fallthru
      _
    // Predicated region
    $region38: #{tpu_custom_call.1} parent=1 // pred_check
      _
    $region39: #{tpu_custom_call.1} parent=1 // pred_check_branch
      %101 = sbr.rel (0) target = $region41
    $region40: #{tpu_custom_call.1} parent=1 // pred_region
      _
    $region41: #{tpu_custom_call.1} parent=1 // pred_fallthru
      _
    // Predicated region
    $region42: #{tpu_custom_call.1} parent=1 // pred_check
      _
    $region43: #{tpu_custom_call.1} parent=1 // pred_check_branch
      %103 = sbr.rel (0) target = $region45
    $region44: #{tpu_custom_call.1} parent=1 // pred_region
      %105 = dma.done [#allocation3], 128
    $region45: #{tpu_custom_call.1} parent=1 // pred_fallthru
      _
    // Predicated region
    $region46: #{tpu_custom_call.1} parent=1 // pred_check
      _
    $region47: #{tpu_custom_call.1} parent=1 // pred_check_branch
      %107 = sbr.rel (0) target = $region49
    $region48: #{tpu_custom_call.1} parent=1 // pred_region
      %109 = dma.done [#allocation6], 128
    $region49: #{tpu_custom_call.1} parent=1 // pred_fallthru
      _
    // Predicated region
    $region50: #{tpu_custom_call.1} parent=1 // pred_check
      _
    $region51: #{tpu_custom_call.1} parent=1 // pred_check_branch
      %111 = sbr.rel (0) target = $region53
    $region52: #{tpu_custom_call.1} parent=1 // pred_region
      %113 = dma.done [#allocation6], 1024
    $region53: #{tpu_custom_call.1} parent=1 // pred_fallthru
      _
    // Predicated region
    $region54: #{tpu_custom_call.1} parent=1 // pred_check
      _
    $region55: #{tpu_custom_call.1} parent=1 // pred_check_branch
      %115 = sbr.rel (0) target = $region57
    $region56: #{tpu_custom_call.1} parent=1 // pred_region
      %117 = dma.done [#allocation9], 1024
    $region57: #{tpu_custom_call.1} parent=1 // pred_fallthru
      _
    // Predicated region
    $region58: #{tpu_custom_call.1} parent=1 // pred_check
      _
    $region59: #{tpu_custom_call.1} parent=1 // pred_check_branch
      %119 = sbr.rel (0) target = $region61
    $region60: #{tpu_custom_call.1} parent=1 // pred_region
      %121 = dma.done [#allocation9], 1024
    $region61: #{tpu_custom_call.1} parent=1 // pred_fallthru
      _
    // Predicated region
    $region62: #{tpu_custom_call.1} parent=1 // pred_check
      _
    $region63: #{tpu_custom_call.1} parent=1 // pred_check_branch
      %123 = sbr.rel (0) target = $region65
    $region64: #{tpu_custom_call.1} parent=1 // pred_region
      %125 = dma.done [#allocation12], 2048
    $region65: #{tpu_custom_call.1} parent=1 // pred_fallthru
      _
    %v126 = vld [vmem:[#allocation2] sm:$0xff]
    %v127 = vpack.c.bf16 %v126, %v126
    %v128 = vld [vmem:[#allocation7] sm:$0xf]
    %v129 = vld [vmem:[#allocation7 + $0x4] sm:$0xf]
    %v130 = vld [vmem:[#allocation7 + $0x8] sm:$0xf]
    %v131 = vld [vmem:[#allocation7 + $0xc] sm:$0xf]
    %v132 = vld [vmem:[#allocation7 + $0x10] sm:$0xf]
    %v133 = vld [vmem:[#allocation7 + $0x14] sm:$0xf]
    %v134 = vld [vmem:[#allocation7 + $0x18] sm:$0xf]
    %v135 = vld [vmem:[#allocation7 + $0x1c] sm:$0xf]
    %v136 = vld [vmem:[#allocation7 + $0x20] sm:$0xf]
    %v137 = vld [vmem:[#allocation7 + $0x24] sm:$0xf]
    %v138 = vld [vmem:[#allocation7 + $0x28] sm:$0xf]
    %v139 = vld [vmem:[#allocation7 + $0x2c] sm:$0xf]
    %v140 = vld [vmem:[#allocation7 + $0x30] sm:$0xf]
    %v141 = vld [vmem:[#allocation7 + $0x34] sm:$0xf]
    %v142 = vld [vmem:[#allocation7 + $0x38] sm:$0xf]
    %v143 = vld [vmem:[#allocation7 + $0x3c] sm:$0xf]
    %v144 = vld [vmem:[%s3] sm:$0x1]
    %v146 = vperm.slane %v144, 0
    %v164 = vunpack.c.l.b16 %v128
    %v165 = vunpack.c.l.b16 %v129
    %v166 = vunpack.c.l.b16 %v130
    %v167 = vunpack.c.l.b16 %v131
    %v168 = vunpack.c.l.b16 %v132
    %v169 = vunpack.c.l.b16 %v133
    %v170 = vunpack.c.l.b16 %v134
    %v171 = vunpack.c.l.b16 %v135
    %v172 = vunpack.c.l.b16 %v136
    %v173 = vunpack.c.l.b16 %v137
    %v174 = vunpack.c.l.b16 %v138
    %v175 = vunpack.c.l.b16 %v139
    %v176 = vunpack.c.l.b16 %v140
    %v177 = vunpack.c.l.b16 %v141
    %v178 = vunpack.c.l.b16 %v142
    %v179 = vunpack.c.l.b16 %v143
    %v180 = vpack.c.b16 %v165, %v164
    %v181 = vpack.c.b16 %v167, %v166
    %v182 = vpack.c.b16 %v169, %v168
    %v183 = vpack.c.b16 %v171, %v170
    %v184 = vpack.c.b16 %v173, %v172
    %v185 = vpack.c.b16 %v175, %v174
    %v186 = vpack.c.b16 %v177, %v176
    %v187 = vpack.c.b16 %v179, %v178
    %196 = vmatpush.bf16.msra.mxu0 %v187
    %197 = vmatpush.bf16.msra.mxu0 %v186
    %198 = vmatpush.bf16.msra.mxu0 %v185
    %199 = vmatpush.bf16.msra.mxu0 %v184
    %200 = vmatpush.bf16.msra.mxu0 %v183
    %201 = vmatpush.bf16.msra.mxu0 %v182
    %202 = vmatpush.bf16.msra.mxu0 %v181
    %203 = vmatpush.bf16.msra.mxu0 %v180
    %204 = vmatmul.bf16.gmra.mxu0 %v127
    %v205 = vpop.f32.mrf.mxu0
    %v206 = vadd.f32 %v146, %v205
    %v207 = vpop.f32.mrf.mxu0
    %208 = vdwg.mxu0
    %v209 = vmax.f32 %v206, 0.0
    %v210 = vpack.c.bf16 %v209, %v209
    %v211 = vld [vmem:[#allocation8] sm:$0xf]
    %v212 = vld [vmem:[#allocation8 + $0x4] sm:$0xf]
    %v213 = vld [vmem:[#allocation8 + $0x8] sm:$0xf]
    %v214 = vld [vmem:[#allocation8 + $0xc] sm:$0xf]
    %v215 = vld [vmem:[#allocation8 + $0x10] sm:$0xf]
    %v216 = vld [vmem:[#allocation8 + $0x14] sm:$0xf]
    %v217 = vld [vmem:[#allocation8 + $0x18] sm:$0xf]
    %v218 = vld [vmem:[#allocation8 + $0x1c] sm:$0xf]
    %v219 = vld [vmem:[#allocation8 + $0x20] sm:$0xf]
    %v220 = vld [vmem:[#allocation8 + $0x24] sm:$0xf]
    %v221 = vld [vmem:[#allocation8 + $0x28] sm:$0xf]
    %v222 = vld [vmem:[#allocation8 + $0x2c] sm:$0xf]
    %v223 = vld [vmem:[#allocation8 + $0x30] sm:$0xf]
    %v224 = vld [vmem:[#allocation8 + $0x34] sm:$0xf]
    %v225 = vld [vmem:[#allocation8 + $0x38] sm:$0xf]
    %v226 = vld [vmem:[#allocation8 + $0x3c] sm:$0xf]
    %v227 = vld [vmem:[%s5] sm:$0x1]
    %v229 = vperm.slane %v227, 0
    %v247 = vunpack.c.l.b16 %v211
    %v248 = vunpack.c.l.b16 %v212
    %v249 = vunpack.c.l.b16 %v213
    %v250 = vunpack.c.l.b16 %v214
    %v251 = vunpack.c.l.b16 %v215
    %v252 = vunpack.c.l.b16 %v216
    %v253 = vunpack.c.l.b16 %v217
    %v254 = vunpack.c.l.b16 %v218
    %v255 = vunpack.c.l.b16 %v219
    %v256 = vunpack.c.l.b16 %v220
    %v257 = vunpack.c.l.b16 %v221
    %v258 = vunpack.c.l.b16 %v222
    %v259 = vunpack.c.l.b16 %v223
    %v260 = vunpack.c.l.b16 %v224
    %v261 = vunpack.c.l.b16 %v225
    %v262 = vunpack.c.l.b16 %v226
    %v263 = vpack.c.b16 %v248, %v247
    %v264 = vpack.c.b16 %v250, %v249
    %v265 = vpack.c.b16 %v252, %v251
    %v266 = vpack.c.b16 %v254, %v253
    %v267 = vpack.c.b16 %v256, %v255
    %v268 = vpack.c.b16 %v258, %v257
    %v269 = vpack.c.b16 %v260, %v259
    %v270 = vpack.c.b16 %v262, %v261
    %279 = vmatpush.bf16.msra.mxu0 %v270
    %280 = vmatpush.bf16.msra.mxu0 %v269
    %281 = vmatpush.bf16.msra.mxu0 %v268
    %282 = vmatpush.bf16.msra.mxu0 %v267
    %283 = vmatpush.bf16.msra.mxu0 %v266
    %284 = vmatpush.bf16.msra.mxu0 %v265
    %285 = vmatpush.bf16.msra.mxu0 %v264
    %286 = vmatpush.bf16.msra.mxu0 %v263
    %287 = vmatmul.bf16.gmra.mxu0 %v210
    %v288 = vpop.f32.mrf.mxu0
    %v289 = vadd.f32 %v229, %v288
    %v290 = vpop.f32.mrf.mxu0
    %291 = vdwg.mxu0
    %v292 = vmax.f32 %v289, 0.0
    %v293 = vpack.c.bf16 %v292, %v292
    %v294 = vld [vmem:[#allocation10] sm:$0xf]
    %v295 = vld [vmem:[#allocation10 + $0x4] sm:$0xf]
    %v296 = vld [vmem:[#allocation10 + $0x8] sm:$0xf]
    %v297 = vld [vmem:[#allocation10 + $0xc] sm:$0xf]
    %v298 = vld [vmem:[#allocation10 + $0x10] sm:$0xf]
    %v299 = vld [vmem:[#allocation10 + $0x14] sm:$0xf]
    %v300 = vld [vmem:[#allocation10 + $0x18] sm:$0xf]
    %v301 = vld [vmem:[#allocation10 + $0x1c] sm:$0xf]
    %v302 = vld [vmem:[#allocation10 + $0x20] sm:$0xf]
    %v303 = vld [vmem:[#allocation10 + $0x24] sm:$0xf]
    %v304 = vld [vmem:[#allocation10 + $0x28] sm:$0xf]
    %v305 = vld [vmem:[#allocation10 + $0x2c] sm:$0xf]
    %v306 = vld [vmem:[#allocation10 + $0x30] sm:$0xf]
    %v307 = vld [vmem:[#allocation10 + $0x34] sm:$0xf]
    %v308 = vld [vmem:[#allocation10 + $0x38] sm:$0xf]
    %v309 = vld [vmem:[#allocation10 + $0x3c] sm:$0xf]
    %v310 = vld [vmem:[%s7] sm:$0x1]
    %v312 = vperm.slane %v310, 0
    %v330 = vunpack.c.l.b16 %v294
    %v331 = vunpack.c.l.b16 %v295
    %v332 = vunpack.c.l.b16 %v296
    %v333 = vunpack.c.l.b16 %v297
    %v334 = vunpack.c.l.b16 %v298
    %v335 = vunpack.c.l.b16 %v299
    %v336 = vunpack.c.l.b16 %v300
    %v337 = vunpack.c.l.b16 %v301
    %v338 = vunpack.c.l.b16 %v302
    %v339 = vunpack.c.l.b16 %v303
    %v340 = vunpack.c.l.b16 %v304
    %v341 = vunpack.c.l.b16 %v305
    %v342 = vunpack.c.l.b16 %v306
    %v343 = vunpack.c.l.b16 %v307
    %v344 = vunpack.c.l.b16 %v308
    %v345 = vunpack.c.l.b16 %v309
    %v346 = vpack.c.b16 %v331, %v330
    %v347 = vpack.c.b16 %v333, %v332
    %v348 = vpack.c.b16 %v335, %v334
    %v349 = vpack.c.b16 %v337, %v336
    %v350 = vpack.c.b16 %v339, %v338
    %v351 = vpack.c.b16 %v341, %v340
    %v352 = vpack.c.b16 %v343, %v342
    %v353 = vpack.c.b16 %v345, %v344
    %362 = vmatpush.bf16.msra.mxu0 %v353
    %363 = vmatpush.bf16.msra.mxu0 %v352
    %364 = vmatpush.bf16.msra.mxu0 %v351
    %365 = vmatpush.bf16.msra.mxu0 %v350
    %366 = vmatpush.bf16.msra.mxu0 %v349
    %367 = vmatpush.bf16.msra.mxu0 %v348
    %368 = vmatpush.bf16.msra.mxu0 %v347
    %369 = vmatpush.bf16.msra.mxu0 %v346
    %370 = vmatmul.bf16.gmra.mxu0 %v293
    %v371 = vpop.f32.mrf.mxu0
    %v372 = vadd.f32 %v312, %v371
    %v373 = vpop.f32.mrf.mxu0
    %374 = vdwg.mxu0
    %v375 = vmax.f32 %v372, 0.0
    %v376 = vpack.c.bf16 %v375, %v375
    %v377 = vld [vmem:[#allocation11] sm:$0xff]
    %v378 = vld [vmem:[#allocation11 + $0x8] sm:$0xff]
    %v379 = vld [vmem:[#allocation11 + $0x10] sm:$0xff]
    %v380 = vld [vmem:[#allocation11 + $0x18] sm:$0xff]
    %v381 = vld [vmem:[#allocation11 + $0x20] sm:$0xff]
    %v382 = vld [vmem:[#allocation11 + $0x28] sm:$0xff]
    %v383 = vld [vmem:[#allocation11 + $0x30] sm:$0xff]
    %v384 = vld [vmem:[#allocation11 + $0x38] sm:$0xff]
    %v385 = vld [vmem:[#allocation11 + $0x40] sm:$0xff]
    %v386 = vld [vmem:[#allocation11 + $0x48] sm:$0xff]
    %v387 = vld [vmem:[#allocation11 + $0x50] sm:$0xff]
    %v388 = vld [vmem:[#allocation11 + $0x58] sm:$0xff]
    %v389 = vld [vmem:[#allocation11 + $0x60] sm:$0xff]
    %v390 = vld [vmem:[#allocation11 + $0x68] sm:$0xff]
    %v391 = vld [vmem:[#allocation11 + $0x70] sm:$0xff]
    %v392 = vld [vmem:[#allocation11 + $0x78] sm:$0xff]
    %v393 = vld [vmem:[%s9] sm:$0x3]
    %v395 = vperm.slane %v393, 0
    %v396 = vperm.slane %v393, 1
    %v415 = vunpack.c.l.b16 %v377
    %v416 = vunpack.c.h.b16 %v377
    %v417 = vunpack.c.l.b16 %v378
    %v418 = vunpack.c.h.b16 %v378
    %v419 = vunpack.c.l.b16 %v379
    %v420 = vunpack.c.h.b16 %v379
    %v421 = vunpack.c.l.b16 %v380
    %v422 = vunpack.c.h.b16 %v380
    %v423 = vunpack.c.l.b16 %v381
    %v424 = vunpack.c.h.b16 %v381
    %v425 = vunpack.c.l.b16 %v382
    %v426 = vunpack.c.h.b16 %v382
    %v427 = vunpack.c.l.b16 %v383
    %v428 = vunpack.c.h.b16 %v383
    %v429 = vunpack.c.l.b16 %v384
    %v430 = vunpack.c.h.b16 %v384
    %v431 = vunpack.c.l.b16 %v385
    %v432 = vunpack.c.h.b16 %v385
    %v433 = vunpack.c.l.b16 %v386
    %v434 = vunpack.c.h.b16 %v386
    %v435 = vunpack.c.l.b16 %v387
    %v436 = vunpack.c.h.b16 %v387
    %v437 = vunpack.c.l.b16 %v388
    %v438 = vunpack.c.h.b16 %v388
    %v439 = vunpack.c.l.b16 %v389
    %v440 = vunpack.c.h.b16 %v389
    %v441 = vunpack.c.l.b16 %v390
    %v442 = vunpack.c.h.b16 %v390
    %v443 = vunpack.c.l.b16 %v391
    %v444 = vunpack.c.h.b16 %v391
    %v445 = vunpack.c.l.b16 %v392
    %v446 = vunpack.c.h.b16 %v392
    %v447 = vpack.c.b16 %v417, %v415
    %v448 = vpack.c.b16 %v418, %v416
    %v449 = vpack.c.b16 %v421, %v419
    %v450 = vpack.c.b16 %v422, %v420
    %v451 = vpack.c.b16 %v425, %v423
    %v452 = vpack.c.b16 %v426, %v424
    %v453 = vpack.c.b16 %v429, %v427
    %v454 = vpack.c.b16 %v430, %v428
    %v455 = vpack.c.b16 %v433, %v431
    %v456 = vpack.c.b16 %v434, %v432
    %v457 = vpack.c.b16 %v437, %v435
    %v458 = vpack.c.b16 %v438, %v436
    %v459 = vpack.c.b16 %v441, %v439
    %v460 = vpack.c.b16 %v442, %v440
    %v461 = vpack.c.b16 %v445, %v443
    %v462 = vpack.c.b16 %v446, %v444
    %479 = vmatpush.bf16.msra.mxu0 %v461
    %480 = vmatpush.bf16.msra.mxu0 %v459
    %481 = vmatpush.bf16.msra.mxu0 %v457
    %482 = vmatpush.bf16.msra.mxu0 %v455
    %483 = vmatpush.bf16.msra.mxu0 %v453
    %484 = vmatpush.bf16.msra.mxu0 %v451
    %485 = vmatpush.bf16.msra.mxu0 %v449
    %486 = vmatpush.bf16.msra.mxu0 %v447
    %487 = vmatmul.bf16.gmra.mxu0 %v376
    %v488 = vpop.f32.mrf.mxu0
    %v489 = vadd.f32 %v395, %v488
    %v490 = vpop.f32.mrf.mxu0
    %491 = vdwg.mxu0
    %492 = vmatpush.bf16.msra.mxu0 %v462
    %493 = vmatpush.bf16.msra.mxu0 %v460
    %494 = vmatpush.bf16.msra.mxu0 %v458
    %495 = vmatpush.bf16.msra.mxu0 %v456
    %496 = vmatpush.bf16.msra.mxu0 %v454
    %497 = vmatpush.bf16.msra.mxu0 %v452
    %498 = vmatpush.bf16.msra.mxu0 %v450
    %499 = vmatpush.bf16.msra.mxu0 %v448
    %500 = vmatmul.bf16.gmra.mxu0 %v376
    %v501 = vpop.f32.mrf.mxu0
    %v502 = vadd.f32 %v396, %v501
    %v503 = vpop.f32.mrf.mxu0
    %504 = vdwg.mxu0
    %v505 = vtanh.pop %v502
    %v506 = vadd.f32 %v505, 1.0
    %v507 = vmul.f32 %v506, 6.0
    %v508 = vadd.f32 %v507, -10.0
    %v509 = vmul.f32 %v508, 1.442695
    %v510 = vpow.pop %v509
    %v511 = vld [vmem:[#allocation5] sm:$0xff]
    %v512 = vmul.f32 %v511, %v510
    %v513 = vadd.f32 %v489, %v512
    %v514 = vtanh.pop %v489
    %v515 = vtanh.pop %v513
    %v516 = vmul.f32 %v511, -0.5
    %v517 = vmul.f32 %v516, %v511
    %v518 = vsub.f32 %v517, %v508
    %v519 = vmul.f32 %v515, %v515
    %v520 = vsub.f32 1.0, %v519
    %v521 = vmax.f32 %v520, 0.0
    %v522 = vadd.f32 %v521, 1e-06
    %v523 = vlog2.pop %v522
    %v524 = vmul.f32 %v523, 0.6931472
    %v525 = vsub.f32 %v518, %v524
    %v526 = vlaneseq
    %v527 = vand.u32 %v526, 127
    %vm528 = vcmp.lt.s32.totalorder %v527, 4
    %v529 = vsel %vm528, %v525, 0.0
    %530 = vadd.xlane.f32.xlu0 %v529
    %v531 = vpop.xlane.xlu0 %530
    %v532 = vsub.f32 %v531, 3.675754
    %533 = vst [vmem:[#allocation13] sm:$0xff] %v514
    %534 = vst [vmem:[#allocation13 + $0x8] sm:$0xff] %v515
    %535 = vst [vmem:[#allocation13 + $0x10] sm:$0xff] %v508
    %536 = vst [vmem:[#allocation13 + $0x18] sm:$0xff] %v532
    // Predicated region
    $region66: #{tpu_custom_call.1} parent=1 // pred_check
      _
    $region67: #{tpu_custom_call.1} parent=1 // pred_check_branch
      %538 = sbr.rel (0) target = $region69
    $region68: #{tpu_custom_call.1} parent=1 // pred_region
      %540 = vsyncadd [#allocation4], 0
      %s542 = sshll.u32 [#allocation13], 4
      %s543 = int_to_ptr.vmem [resolvable:$true] %s542
      %s544 = sshll.u32 %s10, 4
      %s545 = int_to_ptr.hbm [resolvable:$true] %s544
      %547 = dma.vmem_to_hbm [thread:$0]  %s543, 512, %s545, [#allocation4]
    $region69: #{tpu_custom_call.1} parent=1 // pred_fallthru
      _
    // Predicated region
    $region70: #{tpu_custom_call.1} parent=1 // pred_check
      _
    $region71: #{tpu_custom_call.1} parent=1 // pred_check_branch
      %549 = sbr.rel (0) target = $region73
    $region72: #{tpu_custom_call.1} parent=1 // pred_region
      %551 = dma.done [#allocation4], 512
    $region73: #{tpu_custom_call.1} parent=1 // pred_fallthru
      _
    %552 = vsyncpa [#allocation3], 1
    %553 = vsyncpa [#allocation6], 1
    %554 = vsyncpa [#allocation9], 1
    %555 = vsyncpa [#allocation12], 1
    %556 = vsyncpa [#allocation4], 1

</llo_original>
